<compile_context>
chip_gen: v7x
topology: tpu7x:2x2x1
jax: 0.10.0
libtpu: 0.0.40
codegen_flags: <defaults>
</compile_context>

<pallas_src>
import jax
import jax.numpy as jnp
from jax.experimental import pallas as pl
from jax.experimental.pallas import tpu as pltpu


NEG_SLOPE = 0.01  # nn.LeakyReLU() default negative_slope
LANE = 128
SUBLANE = 8
VMEM_BUDGET = 44 * 1024 * 1024   # tile-sizing budget (headroom under v7x 64 MiB)
VMEM_LIMIT_CAP = 56 * 1024 * 1024


def _round_up(x, mult):
    return ((x + mult - 1) // mult) * mult


def _leaky_relu(v):
    # max(v, slope*v) == LeakyReLU(v) for 0 < slope < 1; 2 VPU ops vs 3.
    return jnp.maximum(v, NEG_SLOPE * v)


def decoder_kernel(x_ref, w1_ref, b1_ref, w2_ref, b2_ref, w3_ref, b3_ref, out_ref):
    # x_ref:  [TILE_B, b]  (bf16)     w1_ref: [b,  Hp] (bf16)   b1_ref: [1, Hp] (f32)
    # w2_ref: [Hp, Hp] (bf16)         b2_ref: [1, Hp] (f32)
    # w3_ref: [Hp, TILE_N] (bf16)     b3_ref: [1, TILE_N] (f32)
    # out_ref:[TILE_B, OUT_N] (f32) with OUT_N <= TILE_N
    x = x_ref[...]
    h = jnp.dot(x, w1_ref[...], preferred_element_type=jnp.float32)
    h = _leaky_relu(h + b1_ref[...])                       # f32 elementwise
    h = jnp.dot(h.astype(jnp.bfloat16), w2_ref[...],
                preferred_element_type=jnp.float32)
    h = _leaky_relu(h + b2_ref[...])
    o = jnp.dot(h.astype(jnp.bfloat16), w3_ref[...],
                preferred_element_type=jnp.float32)
    o = _leaky_relu(o + b3_ref[...])                       # LeakyReLU after fc3 too
    out_ref[...] = o[:, : out_ref.shape[1]].astype(out_ref.dtype)


def _vmem_bytes(tile_b, tile_n, b_in, hp, op, n_out):
    """Rough VMEM footprint (bytes) for one pipelined grid step."""
    w3_bufs = 1 if tile_n == op else 2              # double-buffered only when streamed
    weights = 2 * (b_in * hp + hp * hp) + w3_bufs * 2 * hp * tile_n     # bf16
    biases = 4 * (2 * hp) + w3_bufs * 4 * tile_n                        # f32
    x_buf = 2 * 2 * tile_b * b_in                                       # bf16, 2 bufs
    out_block_n = min(tile_n, n_out)
    out_buf = 2 * 4 * tile_b * out_block_n                              # f32, 2 bufs
    interm = tile_b * hp * (4 + 2) * 2 + 4 * tile_b * tile_n            # h (f32+bf16), o
    return weights + biases + x_buf + out_buf + interm


def _largest_fitting_tile_n(op, fits):
    """Largest multiple of 128 dividing op (itself a multiple of 128) passing fits()."""
    q = op // LANE
    divs, d = set(), 1
    while d * d <= q:
        if q % d == 0:
            divs.add(d)
            divs.add(q // d)
        d += 1
    for d in sorted(divs, reverse=True):
        tn = d * LANE
        if fits(tn):
            return tn
    return LANE


def decoder_forward(x, params, m, n, *, tile_b=512):
    """Pallas implementation of decoderNet.forward.

    x: any shape whose elements flatten to (-1, b) (PyTorch does x.view(-1, 1, b)).
    params: lane-padded bf16 weights / f32 biases from init_params.
    Returns: [B, 1, m, n] float32, matching the PyTorch output shape.
    """
    w1, b1, w2, b2, w3, b3 = params
    w1 = w1.astype(jnp.bfloat16)
    w2 = w2.astype(jnp.bfloat16)
    w3 = w3.astype(jnp.bfloat16)
    b1 = b1.astype(jnp.float32)
    b2 = b2.astype(jnp.float32)
    b3 = b3.astype(jnp.float32)

    b_in = w1.shape[0]
    hp = w1.shape[1]
    op = w3.shape[1]
    n_out = m * n

    x2d = x.reshape(-1, b_in).astype(jnp.bfloat16)
    B = x2d.shape[0]

    # ---- batch tile: multiple of 8 sublanes; shrink for small batches --------
    tile_b = _round_up(max(SUBLANE, min(tile_b, _round_up(B, SUBLANE))), SUBLANE)
    if B > SUBLANE and _round_up(B, SUBLANE) <= tile_b:
        # Whole batch would land in one grid step: split in two so both v7x
        # TensorCores get work (no-op on single-TC v5e/v6e).
        tile_b = _round_up((B + 1) // 2, SUBLANE)

    # ---- output (N) tile: stream w3 only when it would not fit VMEM ----------
    def _fits(tb, tn):
        return _vmem_bytes(tb, tn, b_in, hp, op, n_out) <= VMEM_BUDGET

    lane_exact = (n_out % LANE == 0)
    if lane_exact and not _fits(tile_b, op):
        tile_n = _largest_fitting_tile_n(op, lambda tn: _fits(tile_b, tn))
    else:
        tile_n = op
    while not _fits(tile_b, tile_n) and tile_b > SUBLANE:
        tile_b = max(SUBLANE, _round_up(tile_b // 2, SUBLANE))

    B_pad = _round_up(B, tile_b)
    if B_pad != B:
        x2d = jnp.pad(x2d, ((0, B_pad - B), (0, 0)))

    grid_b = B_pad // tile_b
    grid_n = op // tile_n
    out_block_n = min(tile_n, n_out)      # tiny m*n: write only real columns

    est = _vmem_bytes(tile_b, tile_n, b_in, hp, op, n_out)
    vmem_limit = int(min(VMEM_LIMIT_CAP, max(32 * 1024 * 1024, 2 * est)))

    flops = int(2 * B_pad * (grid_n * (b_in * hp + hp * hp) + hp * op))
    bytes_accessed = int(
        2 * B_pad * b_in                          # x (bf16)
        + 2 * (b_in * hp + hp * hp + hp * op)     # weights (bf16)
        + 4 * (2 * hp + op)                       # biases (f32)
        + 4 * B_pad * n_out                       # out (f32)
    )

    def _call(single_buffer_weights):
        def const_spec(shape, index_map):
            # Constant index_map -> single-buffered (halves resident-weight VMEM).
            if single_buffer_weights:
                return pl.BlockSpec(shape, index_map, pipeline_mode=pl.Buffered(1))
            return pl.BlockSpec(shape, index_map)

        if grid_n == 1:
            w3_spec = const_spec((hp, tile_n), lambda i, j: (0, j))
            b3_spec = const_spec((1, tile_n), lambda i, j: (0, j))
        else:  # streamed along N: keep default double buffering for overlap
            w3_spec = pl.BlockSpec((hp, tile_n), lambda i, j: (0, j))
            b3_spec = pl.BlockSpec((1, tile_n), lambda i, j: (0, j))

        return pl.pallas_call(
            decoder_kernel,
            out_shape=jax.ShapeDtypeStruct((B_pad, n_out), jnp.float32),
            grid=(grid_b, grid_n),
            in_specs=[
                pl.BlockSpec((tile_b, b_in), lambda i, j: (i, 0)),   # x: streamed
                const_spec((b_in, hp), lambda i, j: (0, 0)),         # VMEM-resident
                const_spec((1, hp), lambda i, j: (0, 0)),
                const_spec((hp, hp), lambda i, j: (0, 0)),
                const_spec((1, hp), lambda i, j: (0, 0)),
                w3_spec,
                b3_spec,
            ],
            out_specs=pl.BlockSpec((tile_b, out_block_n), lambda i, j: (i, j)),
            compiler_params=pltpu.CompilerParams(
                dimension_semantics=("parallel", "parallel"),
                vmem_limit_bytes=vmem_limit,
            ),
            cost_estimate=pl.CostEstimate(
                flops=flops, transcendentals=0, bytes_accessed=bytes_accessed),
        )(x2d, w1, b1, w2, b2, w3, b3)

    try:
        out2d = _call(True)
    except Exception:
        # Fallback for jax versions without BlockSpec(pipeline_mode=Buffered(1));
        # identical math, default double-buffered weights.
        out2d = _call(False)

    out = out2d[:B]
    return out.reshape(B, 1, m, n)


def init_params(key, m, n, b, alpha=1):
    """Deterministic Xavier-normal weights, zero biases (as in __init__).

    Weights are stored pre-transposed ([in, out]) so the kernel computes x @ W,
    matching PyTorch's x @ W.T.  Hidden and output feature dims are zero-padded
    to multiples of 128 lanes (exact: zero weight + zero bias -> LeakyReLU(0)=0)
    and the weights are cast to bfloat16 for the MXU; biases stay float32.
    """
    H = 64 * alpha
    O = m * n
    Hp = _round_up(H, LANE)
    Op = _round_up(O, LANE)

    def xavier(key, fan_in, fan_out):
        std = (2.0 / (fan_in + fan_out)) ** 0.5
        # torch weight is [out, in]; sample that then transpose to [in, out]
        w = std * jax.random.normal(key, (fan_out, fan_in), dtype=jnp.float32)
        return w.T

    k1, k2, k3 = jax.random.split(key, 3)
    w1 = jnp.pad(xavier(k1, b, H), ((0, 0), (0, Hp - H)))
    w2 = jnp.pad(xavier(k2, H, H), ((0, Hp - H), (0, Hp - H)))
    w3 = jnp.pad(xavier(k3, H, O), ((0, Hp - H), (0, Op - O)))
    w1 = w1.astype(jnp.bfloat16)
    w2 = w2.astype(jnp.bfloat16)
    w3 = w3.astype(jnp.bfloat16)
    b1 = jnp.zeros((1, Hp), jnp.float32)
    b2 = jnp.zeros((1, Hp), jnp.float32)
    b3 = jnp.zeros((1, Op), jnp.float32)
    return (w1, b1, w2, b2, w3, b3)


def _reference_forward(x, params, m, n):
    """Plain-JAX reference mirroring the kernel numerics (bf16 dot inputs, f32 acc)."""
    w1, b1, w2, b2, w3, b3 = params
    b_in = w1.shape[0]
    x2d = x.reshape(-1, b_in).astype(jnp.bfloat16)
    h = _leaky_relu(jnp.dot(x2d, w1, preferred_element_type=jnp.float32) + b1)
    h = _leaky_relu(jnp.dot(h.astype(jnp.bfloat16), w2,
                            preferred_element_type=jnp.float32) + b2)
    o = _leaky_relu(jnp.dot(h.astype(jnp.bfloat16), w3,
                            preferred_element_type=jnp.float32) + b3)
    o = o[:, : m * n]
    return o.reshape(-1, 1, m, n)


if __name__ == "__main__":
    # Small shapes consistent with the module: b=8 inputs, m=4, n=4, ALPHA=1
    m, n, b, alpha = 4, 4, 8, 1
    batch = 2

    key = jax.random.PRNGKey(0)
    k_x, k_p = jax.random.split(key)
    x = jax.random.normal(k_x, (batch, 1, b), dtype=jnp.float32)
    params = init_params(k_p, m, n, b, alpha)

    out = decoder_forward(x, params, m, n)
    out = jax.block_until_ready(out)

    ref = _reference_forward(x, params, m, n)
    assert out.shape == (batch, 1, m, n), out.shape
    assert jnp.allclose(out, ref, atol=2e-3, rtol=2e-3), "mismatch vs reference"

    print("KERNEL_OK")
</pallas_src>

<mosaic_0001>
module attributes {stable_mosaic.version = 11 : i64} {
  func.func @decoder_kernel(%arg0: i32, %arg1: i32, %arg2: memref<8x8xbf16, #tpu.memory_space<vmem>>, %arg3: memref<8x128xbf16, #tpu.memory_space<vmem>>, %arg4: memref<1x128xf32, #tpu.memory_space<vmem>>, %arg5: memref<128x128xbf16, #tpu.memory_space<vmem>>, %arg6: memref<1x128xf32, #tpu.memory_space<vmem>>, %arg7: memref<128x128xbf16, #tpu.memory_space<vmem>>, %arg8: memref<1x128xf32, #tpu.memory_space<vmem>>, %arg9: memref<8x16xf32, #tpu.memory_space<vmem>>) attributes {dimension_semantics = [#tpu.dimension_semantics<parallel>, #tpu.dimension_semantics<parallel>], iteration_bounds = array<i64: 1, 1>, scalar_prefetch = 0 : i64, scratch_operands = 0 : i64, tpu.core_type = #tpu.core_type<tc>, window_params = [{transform_indices = @transform_0, window_bounds = array<i64: 8, 8>}, {pipeline_mode = #tpu.pipeline_mode<synchronous>, transform_indices = @transform_1, window_bounds = array<i64: 8, 128>}, {pipeline_mode = #tpu.pipeline_mode<synchronous>, transform_indices = @transform_2, window_bounds = array<i64: 1, 128>}, {pipeline_mode = #tpu.pipeline_mode<synchronous>, transform_indices = @transform_3, window_bounds = array<i64: 128, 128>}, {pipeline_mode = #tpu.pipeline_mode<synchronous>, transform_indices = @transform_4, window_bounds = array<i64: 1, 128>}, {pipeline_mode = #tpu.pipeline_mode<synchronous>, transform_indices = @transform_5, window_bounds = array<i64: 128, 128>}, {pipeline_mode = #tpu.pipeline_mode<synchronous>, transform_indices = @transform_6, window_bounds = array<i64: 1, 128>}, {transform_indices = @transform_7, window_bounds = array<i64: 8, 16>}]} {
    %c0 = arith.constant 0 : index
    %c0_0 = arith.constant 0 : index
    %0 = vector.load %arg2[%c0, %c0_0] : memref<8x8xbf16, #tpu.memory_space<vmem>>, vector<8x8xbf16>
    %c0_1 = arith.constant 0 : index
    %c0_2 = arith.constant 0 : index
    %1 = vector.load %arg3[%c0_1, %c0_2] : memref<8x128xbf16, #tpu.memory_space<vmem>>, vector<8x128xbf16>
    %cst = arith.constant dense<0.000000e+00> : vector<8x128xf32>
    %2 = tpu.matmul %0, %1, %cst {dimension_numbers = #tpu.dot_dimension_numbers<[1], [0], [0], [1], [0, 0, 1, 1], [], []>} : vector<8x8xbf16>, vector<8x128xbf16>, vector<8x128xf32> -> vector<8x128xf32>
    %c0_3 = arith.constant 0 : index
    %c0_4 = arith.constant 0 : index
    %3 = vector.load %arg4[%c0_3, %c0_4] : memref<1x128xf32, #tpu.memory_space<vmem>>, vector<1x128xf32>
    %4 = vector.broadcast %3 : vector<1x128xf32> to vector<8x128xf32>
    %5 = arith.addf %2, %4 : vector<8x128xf32>
    %cst_5 = arith.constant 0.00999999977 : f32
    %6 = vector.broadcast %cst_5 : f32 to vector<8x128xf32>
    %7 = arith.mulf %6, %5 : vector<8x128xf32>
    %8 = arith.maximumf %5, %7 : vector<8x128xf32>
    %9 = arith.truncf %8 : vector<8x128xf32> to vector<8x128xbf16>
    %c0_6 = arith.constant 0 : index
    %c0_7 = arith.constant 0 : index
    %10 = vector.load %arg5[%c0_6, %c0_7] : memref<128x128xbf16, #tpu.memory_space<vmem>>, vector<128x128xbf16>
    %cst_8 = arith.constant dense<0.000000e+00> : vector<8x128xf32>
    %11 = tpu.matmul %9, %10, %cst_8 {dimension_numbers = #tpu.dot_dimension_numbers<[1], [0], [0], [1], [0, 0, 1, 1], [], []>} : vector<8x128xbf16>, vector<128x128xbf16>, vector<8x128xf32> -> vector<8x128xf32>
    %c0_9 = arith.constant 0 : index
    %c0_10 = arith.constant 0 : index
    %12 = vector.load %arg6[%c0_9, %c0_10] : memref<1x128xf32, #tpu.memory_space<vmem>>, vector<1x128xf32>
    %13 = vector.broadcast %12 : vector<1x128xf32> to vector<8x128xf32>
    %14 = arith.addf %11, %13 : vector<8x128xf32>
    %cst_11 = arith.constant 0.00999999977 : f32
    %15 = vector.broadcast %cst_11 : f32 to vector<8x128xf32>
    %16 = arith.mulf %15, %14 : vector<8x128xf32>
    %17 = arith.maximumf %14, %16 : vector<8x128xf32>
    %18 = arith.truncf %17 : vector<8x128xf32> to vector<8x128xbf16>
    %c0_12 = arith.constant 0 : index
    %c0_13 = arith.constant 0 : index
    %19 = vector.load %arg7[%c0_12, %c0_13] : memref<128x128xbf16, #tpu.memory_space<vmem>>, vector<128x128xbf16>
    %cst_14 = arith.constant dense<0.000000e+00> : vector<8x128xf32>
    %20 = tpu.matmul %18, %19, %cst_14 {dimension_numbers = #tpu.dot_dimension_numbers<[1], [0], [0], [1], [0, 0, 1, 1], [], []>} : vector<8x128xbf16>, vector<128x128xbf16>, vector<8x128xf32> -> vector<8x128xf32>
    %c0_15 = arith.constant 0 : index
    %c0_16 = arith.constant 0 : index
    %21 = vector.load %arg8[%c0_15, %c0_16] : memref<1x128xf32, #tpu.memory_space<vmem>>, vector<1x128xf32>
    %22 = vector.broadcast %21 : vector<1x128xf32> to vector<8x128xf32>
    %23 = arith.addf %20, %22 : vector<8x128xf32>
    %cst_17 = arith.constant 0.00999999977 : f32
    %24 = vector.broadcast %cst_17 : f32 to vector<8x128xf32>
    %25 = arith.mulf %24, %23 : vector<8x128xf32>
    %26 = arith.maximumf %23, %25 : vector<8x128xf32>
    %27 = vector.extract_strided_slice %26 {offsets = [0, 0], sizes = [8, 16], strides = [1, 1]} : vector<8x128xf32> to vector<8x16xf32>
    %c0_18 = arith.constant 0 : index
    %c0_19 = arith.constant 0 : index
    %28 = vector.load %arg9[%c0_18, %c0_19] : memref<8x16xf32, #tpu.memory_space<vmem>>, vector<8x16xf32>
    tpu.vector_store %arg9[%c0_18, %c0_19], %27 {strides = array<i32>} : memref<8x16xf32, #tpu.memory_space<vmem>>, vector<8x16xf32>,
    return
  }
  func.func @transform_0(%arg0: i32, %arg1: i32) -> (i32, i32) {
    %c0_i32 = arith.constant 0 : i32
    %c0_i32_0 = arith.constant 0 : i32
    return %arg0, %c0_i32 : i32, i32
  }
  func.func @transform_1(%arg0: i32, %arg1: i32) -> (i32, i32) {
    %c0_i32 = arith.constant 0 : i32
    %c0_i32_0 = arith.constant 0 : i32
    %c0_i32_1 = arith.constant 0 : i32
    return %c0_i32, %c0_i32_0 : i32, i32
  }
  func.func @transform_2(%arg0: i32, %arg1: i32) -> (i32, i32) {
    %c0_i32 = arith.constant 0 : i32
    %c0_i32_0 = arith.constant 0 : i32
    %c0_i32_1 = arith.constant 0 : i32
    return %c0_i32, %c0_i32_0 : i32, i32
  }
  func.func @transform_3(%arg0: i32, %arg1: i32) -> (i32, i32) {
    %c0_i32 = arith.constant 0 : i32
    %c0_i32_0 = arith.constant 0 : i32
    %c0_i32_1 = arith.constant 0 : i32
    return %c0_i32, %c0_i32_0 : i32, i32
  }
  func.func @transform_4(%arg0: i32, %arg1: i32) -> (i32, i32) {
    %c0_i32 = arith.constant 0 : i32
    %c0_i32_0 = arith.constant 0 : i32
    %c0_i32_1 = arith.constant 0 : i32
    return %c0_i32, %c0_i32_0 : i32, i32
  }
  func.func @transform_5(%arg0: i32, %arg1: i32) -> (i32, i32) {
    %c0_i32 = arith.constant 0 : i32
    %c0_i32_0 = arith.constant 0 : i32
    return %c0_i32, %arg1 : i32, i32
  }
  func.func @transform_6(%arg0: i32, %arg1: i32) -> (i32, i32) {
    %c0_i32 = arith.constant 0 : i32
    %c0_i32_0 = arith.constant 0 : i32
    return %c0_i32, %arg1 : i32, i32
  }
  func.func @transform_7(%arg0: i32, %arg1: i32) -> (i32, i32) {
    %c0_i32 = arith.constant 0 : i32
    return %arg0, %arg1 : i32, i32
  }
}

module attributes {stable_mosaic.version = 11 : i64} {
  func.func @decoder_kernel(%arg0: i32, %arg1: i32, %arg2: memref<8x8xbf16, #tpu.memory_space<vmem>>, %arg3: memref<8x128xbf16, #tpu.memory_space<vmem>>, %arg4: memref<1x128xf32, #tpu.memory_space<vmem>>, %arg5: memref<128x128xbf16, #tpu.memory_space<vmem>>, %arg6: memref<1x128xf32, #tpu.memory_space<vmem>>, %arg7: memref<128x128xbf16, #tpu.memory_space<vmem>>, %arg8: memref<1x128xf32, #tpu.memory_space<vmem>>, %arg9: memref<8x16xf32, #tpu.memory_space<vmem>>) attributes {dimension_semantics = [#tpu.dimension_semantics<parallel>, #tpu.dimension_semantics<parallel>], iteration_bounds = array<i64: 1, 1>, scalar_prefetch = 0 : i64, scratch_operands = 0 : i64, tpu.core_type = #tpu.core_type<tc>, window_params = [{transform_indices = @transform_0, window_bounds = array<i64: 8, 8>}, {pipeline_mode = #tpu.pipeline_mode<synchronous>, transform_indices = @transform_1, window_bounds = array<i64: 8, 128>}, {pipeline_mode = #tpu.pipeline_mode<synchronous>, transform_indices = @transform_2, window_bounds = array<i64: 1, 128>}, {pipeline_mode = #tpu.pipeline_mode<synchronous>, transform_indices = @transform_3, window_bounds = array<i64: 128, 128>}, {pipeline_mode = #tpu.pipeline_mode<synchronous>, transform_indices = @transform_4, window_bounds = array<i64: 1, 128>}, {transform_indices = @transform_5, window_bounds = array<i64: 128, 128>}, {transform_indices = @transform_6, window_bounds = array<i64: 1, 128>}, {transform_indices = @transform_7, window_bounds = array<i64: 8, 16>}]} {
    %c0 = arith.constant 0 : index
    %c0_0 = arith.constant 0 : index
    %0 = vector.load %arg2[%c0, %c0_0] : memref<8x8xbf16, #tpu.memory_space<vmem>>, vector<8x8xbf16>
    %c0_1 = arith.constant 0 : index
    %c0_2 = arith.constant 0 : index
    %1 = vector.load %arg3[%c0_1, %c0_2] : memref<8x128xbf16, #tpu.memory_space<vmem>>, vector<8x128xbf16>
    %cst = arith.constant dense<0.000000e+00> : vector<8x128xf32>
    %2 = tpu.matmul %0, %1, %cst {dimension_numbers = #tpu.dot_dimension_numbers<[1], [0], [0], [1], [0, 0, 1, 1], [], []>} : vector<8x8xbf16>, vector<8x128xbf16>, vector<8x128xf32> -> vector<8x128xf32>
    %c0_3 = arith.constant 0 : index
    %c0_4 = arith.constant 0 : index
    %3 = vector.load %arg4[%c0_3, %c0_4] : memref<1x128xf32, #tpu.memory_space<vmem>>, vector<1x128xf32>
    %4 = vector.broadcast %3 : vector<1x128xf32> to vector<8x128xf32>
    %5 = arith.addf %2, %4 : vector<8x128xf32>
    %cst_5 = arith.constant 0.00999999977 : f32
    %6 = vector.broadcast %cst_5 : f32 to vector<8x128xf32>
    %7 = arith.mulf %6, %5 : vector<8x128xf32>
    %8 = arith.maximumf %5, %7 : vector<8x128xf32>
    %9 = arith.truncf %8 : vector<8x128xf32> to vector<8x128xbf16>
    %c0_6 = arith.constant 0 : index
    %c0_7 = arith.constant 0 : index
    %10 = vector.load %arg5[%c0_6, %c0_7] : memref<128x128xbf16, #tpu.memory_space<vmem>>, vector<128x128xbf16>
    %cst_8 = arith.constant dense<0.000000e+00> : vector<8x128xf32>
    %11 = tpu.matmul %9, %10, %cst_8 {dimension_numbers = #tpu.dot_dimension_numbers<[1], [0], [0], [1], [0, 0, 1, 1], [], []>} : vector<8x128xbf16>, vector<128x128xbf16>, vector<8x128xf32> -> vector<8x128xf32>
    %c0_9 = arith.constant 0 : index
    %c0_10 = arith.constant 0 : index
    %12 = vector.load %arg6[%c0_9, %c0_10] : memref<1x128xf32, #tpu.memory_space<vmem>>, vector<1x128xf32>
    %13 = vector.broadcast %12 : vector<1x128xf32> to vector<8x128xf32>
    %14 = arith.addf %11, %13 : vector<8x128xf32>
    %cst_11 = arith.constant 0.00999999977 : f32
    %15 = vector.broadcast %cst_11 : f32 to vector<8x128xf32>
    %16 = arith.mulf %15, %14 : vector<8x128xf32>
    %17 = arith.maximumf %14, %16 : vector<8x128xf32>
    %18 = arith.truncf %17 : vector<8x128xf32> to vector<8x128xbf16>
    %c0_12 = arith.constant 0 : index
    %c0_13 = arith.constant 0 : index
    %19 = vector.load %arg7[%c0_12, %c0_13] : memref<128x128xbf16, #tpu.memory_space<vmem>>, vector<128x128xbf16>
    %cst_14 = arith.constant dense<0.000000e+00> : vector<8x128xf32>
    %20 = tpu.matmul %18, %19, %cst_14 {dimension_numbers = #tpu.dot_dimension_numbers<[1], [0], [0], [1], [0, 0, 1, 1], [], []>} : vector<8x128xbf16>, vector<128x128xbf16>, vector<8x128xf32> -> vector<8x128xf32>
    %c0_15 = arith.constant 0 : index
    %c0_16 = arith.constant 0 : index
    %21 = vector.load %arg8[%c0_15, %c0_16] : memref<1x128xf32, #tpu.memory_space<vmem>>, vector<1x128xf32>
    %22 = vector.broadcast %21 : vector<1x128xf32> to vector<8x128xf32>
    %23 = arith.addf %20, %22 : vector<8x128xf32>
    %cst_17 = arith.constant 0.00999999977 : f32
    %24 = vector.broadcast %cst_17 : f32 to vector<8x128xf32>
    %25 = arith.mulf %24, %23 : vector<8x128xf32>
    %26 = arith.maximumf %23, %25 : vector<8x128xf32>
    %27 = vector.extract_strided_slice %26 {offsets = [0, 0], sizes = [8, 16], strides = [1, 1]} : vector<8x128xf32> to vector<8x16xf32>
    %c0_18 = arith.constant 0 : index
    %c0_19 = arith.constant 0 : index
    %28 = vector.load %arg9[%c0_18, %c0_19] : memref<8x16xf32, #tpu.memory_space<vmem>>, vector<8x16xf32>
    tpu.vector_store %arg9[%c0_18, %c0_19], %27 {strides = array<i32>} : memref<8x16xf32, #tpu.memory_space<vmem>>, vector<8x16xf32>,
    return
  }
  func.func @transform_0(%arg0: i32, %arg1: i32) -> (i32, i32) {
    %c0_i32 = arith.constant 0 : i32
    %c0_i32_0 = arith.constant 0 : i32
    return %arg0, %c0_i32 : i32, i32
  }
  func.func @transform_1(%arg0: i32, %arg1: i32) -> (i32, i32) {
    %c0_i32 = arith.constant 0 : i32
    %c0_i32_0 = arith.constant 0 : i32
    %c0_i32_1 = arith.constant 0 : i32
    return %c0_i32, %c0_i32_0 : i32, i32
  }
  func.func @transform_2(%arg0: i32, %arg1: i32) -> (i32, i32) {
    %c0_i32 = arith.constant 0 : i32
    %c0_i32_0 = arith.constant 0 : i32
    %c0_i32_1 = arith.constant 0 : i32
    return %c0_i32, %c0_i32_0 : i32, i32
  }
  func.func @transform_3(%arg0: i32, %arg1: i32) -> (i32, i32) {
    %c0_i32 = arith.constant 0 : i32
    %c0_i32_0 = arith.constant 0 : i32
    %c0_i32_1 = arith.constant 0 : i32
    return %c0_i32, %c0_i32_0 : i32, i32
  }
  func.func @transform_4(%arg0: i32, %arg1: i32) -> (i32, i32) {
    %c0_i32 = arith.constant 0 : i32
    %c0_i32_0 = arith.constant 0 : i32
    %c0_i32_1 = arith.constant 0 : i32
    return %c0_i32, %c0_i32_0 : i32, i32
  }
  func.func @transform_5(%arg0: i32, %arg1: i32) -> (i32, i32) {
    %c0_i32 = arith.constant 0 : i32
    %c0_i32_0 = arith.constant 0 : i32
    return %c0_i32, %arg1 : i32, i32
  }
  func.func @transform_6(%arg0: i32, %arg1: i32) -> (i32, i32) {
    %c0_i32 = arith.constant 0 : i32
    %c0_i32_0 = arith.constant 0 : i32
    return %c0_i32, %arg1 : i32, i32
  }
  func.func @transform_7(%arg0: i32, %arg1: i32) -> (i32, i32) {
    %c0_i32 = arith.constant 0 : i32
    return %arg0, %arg1 : i32, i32
  }
}

</mosaic_0001>

<llo_original>
// kernel: tpu_custom_call.1
$region0: #{tpu_custom_call.1}
  #allocation0 [shape = 'u32[]', space=smem, size = 0x4, offset = 0x4, fixed_abs, tag = 'smem constant byte address 0x4 - core index']
  #allocation1 [shape = 'u32[144,128]{1,0:T(1,128)}', space=vmem, size = 0x12000, scoped, tag = 'internal scratch']
  %s0 = inlined_call_operand.hbm [shape: bf16[8,8], index: 0, kind: input, shape index: {}]
  %s1 = inlined_call_operand.hbm [shape: bf16[8,128], index: 1, kind: input, shape index: {}]
  %s2 = inlined_call_operand.vmem [shape: f32[1,128], index: 2, kind: input, shape index: {}]
  %s3 = inlined_call_operand.hbm [shape: bf16[128,128], index: 3, kind: input, shape index: {}]
  %s4 = inlined_call_operand.vmem [shape: f32[1,128], index: 4, kind: input, shape index: {}]
  %s5 = inlined_call_operand.hbm [shape: bf16[128,128], index: 5, kind: input, shape index: {}]
  %s6 = inlined_call_operand.vmem [shape: f32[1,128], index: 6, kind: input, shape index: {}]
  %s7 = inlined_call_operand.hbm [shape: f32[8,16], index: 7, kind: output, shape index: {}]
  %s8 = sld [smem:[#allocation0]]
  $region54: #{tpu_custom_call.1} parent=0
    _
  %s10 = ssub.s32 1, %s8
  %s11 = scalar_select 0, %s10, %s8
  $region1: #{tpu_custom_call.1} parent=0
    #allocation2 [shape = 'u8[2048]{0}', space=vmem, size = 0x800, scoped, tag = 'input window, operand 0, single buffered']
    #allocation3 [shape = 's32[1]{0}', space=sflag, size = 0x4, scoped, tag = 'scoped memory for tpu_custom_call.1']
    #allocation4 [shape = 's32[1]{0}', space=sflag, size = 0x4, scoped, tag = 'scoped memory for tpu_custom_call.1']
    #allocation5 [shape = 'u8[2048]{0}', space=vmem, size = 0x800, scoped, tag = 'input window, operand 1, single buffered']
    #allocation6 [shape = 's32[1]{0}', space=sflag, size = 0x4, scoped, tag = 'scoped memory for tpu_custom_call.1']
    #allocation7 [shape = 'u8[32768]{0}', space=vmem, size = 0x8000, scoped, tag = 'input window, operand 3, single buffered']
    #allocation8 [shape = 'u8[32768]{0}', space=vmem, size = 0x8000, scoped, tag = 'input window, operand 5, single buffered']
    #allocation9 [shape = 's32[1]{0}', space=sflag, size = 0x4, scoped, tag = 'scoped memory for tpu_custom_call.1']
    #allocation10 [shape = 'u8[4096]{0}', space=vmem, size = 0x1000, scoped, tag = 'output window, operand 0, single buffered']
    %12 = vsyncpa [#allocation3], 0
    %13 = vsyncpa [#allocation6], 0
    %14 = vsyncpa [#allocation9], 0
    %15 = vsyncpa [#allocation4], 0
    // Predicated region
    $region2: #{tpu_custom_call.1} parent=1 // pred_check
      _
    $region3: #{tpu_custom_call.1} parent=1 // pred_check_branch
      %17 = sbr.rel (0) target = $region5
    $region4: #{tpu_custom_call.1} parent=1 // pred_region
      %s19 = ssub.s32 64, 64
      %20 = vsyncadd [#allocation3], %s19
      %s22 = sshll.u32 [#allocation2], 4
      %s23 = int_to_ptr.vmem [resolvable:$true] %s22
      %25 = dma.hbm_to_vmem [thread:$0]  %s0, 64, %s23, [#allocation3]
    $region5: #{tpu_custom_call.1} parent=1 // pred_fallthru
      _
    // Predicated region
    $region6: #{tpu_custom_call.1} parent=1 // pred_check
      _
    $region7: #{tpu_custom_call.1} parent=1 // pred_check_branch
      %27 = sbr.rel (0) target = $region9
    $region8: #{tpu_custom_call.1} parent=1 // pred_region
      %s29 = ssub.s32 64, 64
      %30 = vsyncadd [#allocation6], %s29
      %s32 = sshll.u32 [#allocation5], 4
      %s33 = int_to_ptr.vmem [resolvable:$true] %s32
      %35 = dma.hbm_to_vmem [thread:$0]  %s1, 64, %s33, [#allocation6]
    $region9: #{tpu_custom_call.1} parent=1 // pred_fallthru
      _
    // Predicated region
    $region10: #{tpu_custom_call.1} parent=1 // pred_check
      _
    $region11: #{tpu_custom_call.1} parent=1 // pred_check_branch
      %37 = sbr.rel (0) target = $region13
    $region12: #{tpu_custom_call.1} parent=1 // pred_region
      _
    $region13: #{tpu_custom_call.1} parent=1 // pred_fallthru
      _
    // Predicated region
    $region14: #{tpu_custom_call.1} parent=1 // pred_check
      _
    $region15: #{tpu_custom_call.1} parent=1 // pred_check_branch
      %39 = sbr.rel (0) target = $region17
    $region16: #{tpu_custom_call.1} parent=1 // pred_region
      %s41 = ssub.s32 1024, 1024
      %42 = vsyncadd [#allocation6], %s41
      %s43 = sshll.u32 [#allocation7], 4
      %s44 = int_to_ptr.vmem [resolvable:$true] %s43
      %49 = dma.hbm_to_vmem [thread:$0]  %s3, 1024, %s44, [#allocation6], 64, 64, 4
    $region17: #{tpu_custom_call.1} parent=1 // pred_fallthru
      _
    // Predicated region
    $region18: #{tpu_custom_call.1} parent=1 // pred_check
      _
    $region19: #{tpu_custom_call.1} parent=1 // pred_check_branch
      %51 = sbr.rel (0) target = $region21
    $region20: #{tpu_custom_call.1} parent=1 // pred_region
      _
    $region21: #{tpu_custom_call.1} parent=1 // pred_fallthru
      _
    // Predicated region
    $region22: #{tpu_custom_call.1} parent=1 // pred_check
      _
    $region23: #{tpu_custom_call.1} parent=1 // pred_check_branch
      %53 = sbr.rel (0) target = $region25
    $region24: #{tpu_custom_call.1} parent=1 // pred_region
      %s55 = ssub.s32 1024, 1024
      %56 = vsyncadd [#allocation9], %s55
      %s57 = sshll.u32 [#allocation8], 4
      %s58 = int_to_ptr.vmem [resolvable:$true] %s57
      %63 = dma.hbm_to_vmem [thread:$0]  %s5, 1024, %s58, [#allocation9], 64, 64, 4
    $region25: #{tpu_custom_call.1} parent=1 // pred_fallthru
      _
    // Predicated region
    $region26: #{tpu_custom_call.1} parent=1 // pred_check
      _
    $region27: #{tpu_custom_call.1} parent=1 // pred_check_branch
      %65 = sbr.rel (0) target = $region29
    $region28: #{tpu_custom_call.1} parent=1 // pred_region
      _
    $region29: #{tpu_custom_call.1} parent=1 // pred_fallthru
      _
    // Predicated region
    $region30: #{tpu_custom_call.1} parent=1 // pred_check
      _
    $region31: #{tpu_custom_call.1} parent=1 // pred_check_branch
      %67 = sbr.rel (0) target = $region33
    $region32: #{tpu_custom_call.1} parent=1 // pred_region
      %68 = dma.done [#allocation3], 64
    $region33: #{tpu_custom_call.1} parent=1 // pred_fallthru
      _
    // Predicated region
    $region34: #{tpu_custom_call.1} parent=1 // pred_check
      _
    $region35: #{tpu_custom_call.1} parent=1 // pred_check_branch
      %70 = sbr.rel (0) target = $region37
    $region36: #{tpu_custom_call.1} parent=1 // pred_region
      %71 = dma.done [#allocation6], 64
    $region37: #{tpu_custom_call.1} parent=1 // pred_fallthru
      _
    // Predicated region
    $region38: #{tpu_custom_call.1} parent=1 // pred_check
      _
    $region39: #{tpu_custom_call.1} parent=1 // pred_check_branch
      %73 = sbr.rel (0) target = $region41
    $region40: #{tpu_custom_call.1} parent=1 // pred_region
      %74 = dma.done [#allocation6], 1024
    $region41: #{tpu_custom_call.1} parent=1 // pred_fallthru
      _
    // Predicated region
    $region42: #{tpu_custom_call.1} parent=1 // pred_check
      _
    $region43: #{tpu_custom_call.1} parent=1 // pred_check_branch
      %76 = sbr.rel (0) target = $region45
    $region44: #{tpu_custom_call.1} parent=1 // pred_region
      %77 = dma.done [#allocation9], 1024
    $region45: #{tpu_custom_call.1} parent=1 // pred_fallthru
      _
    %v79 = vld [vmem:[#allocation2] sm:$0xf]
    %v80 = vld [vmem:[#allocation5] sm:$0xf]
    %v81 = vld [vmem:[%s2] sm:$0x1]
    %v83 = vlaneseq
    %v84 = vshrl.u32 %v83, 7
    %v85 = vsub.s32 0, %v84
    %v86 = vrot.slane %v81, %v85
    %vm88 = vcmask 64512
    %v90 = vsel %vm88, %v79, 0
    %vm92 = vcmask 1043456
    %v94 = vsel %vm92, %v80, 0
    %96 = vmatprep.subr.bf16.mxu0 0
    %97 = vmatpush1.bf16.msra.mxu0 %v94
    %98 = vmatprep.subr.bf16.mxu0 0
    %99 = vmatpush1.bf16.msra.mxu0 0
    %100 = vmatprep.subr.bf16.mxu0 0
    %101 = vmatpush1.bf16.msra.mxu0 0
    %102 = vmatprep.subr.bf16.mxu0 0
    %103 = vmatpush1.bf16.msra.mxu0 0
    %104 = vmatprep.subr.bf16.mxu0 0
    %105 = vmatpush1.bf16.msra.mxu0 0
    %106 = vmatprep.subr.bf16.mxu0 0
    %107 = vmatpush1.bf16.msra.mxu0 0
    %108 = vmatprep.subr.bf16.mxu0 0
    %109 = vmatpush1.bf16.msra.mxu0 0
    %110 = vmatprep.subr.bf16.mxu0 0
    %111 = vmatpush1.bf16.msra.mxu0 0
    %112 = vmatprep.subr.bf16.mxu0 0
    %113 = vmatpush1.bf16.msra.mxu0 0
    %114 = vmatprep.subr.bf16.mxu0 0
    %115 = vmatpush1.bf16.msra.mxu0 0
    %116 = vmatprep.subr.bf16.mxu0 0
    %117 = vmatpush1.bf16.msra.mxu0 0
    %118 = vmatprep.subr.bf16.mxu0 0
    %119 = vmatpush1.bf16.msra.mxu0 0
    %120 = vmatprep.subr.bf16.mxu0 0
    %121 = vmatpush1.bf16.msra.mxu0 0
    %122 = vmatprep.subr.bf16.mxu0 0
    %123 = vmatpush1.bf16.msra.mxu0 0
    %124 = vmatprep.subr.bf16.mxu0 0
    %125 = vmatpush1.bf16.msra.mxu0 0
    %126 = vmatprep.subr.bf16.mxu0 0
    %127 = vmatpush1.bf16.msra.mxu0 0
    %128 = vmatprep.mubr.bf16.mxu0 0
    %129 = vmatmul.mubr.bf16.gmra.mrb[0].mxu0 %v90
    %v130 = vpop.f32.mrb[0].mxu0
    %v131 = vadd.f32 %v86, %v130
    %v132 = vpop.f32.mrb[0].mxu0
    %v133 = vpop.f32.mrb[0].mxu0
    %v134 = vpop.f32.mrb[0].mxu0
    %135 = vdwg.mxu0
    %v136 = vmul.f32 %v131, 0.01
    %v137 = vmax.f32 %v131, %v136
    %v138 = vpack.c.bf16 %v137, %v137
    %v139 = vld [vmem:[#allocation7] sm:$0xf]
    %v140 = vld [vmem:[#allocation7 + $0x4] sm:$0xf]
    %v141 = vld [vmem:[#allocation7 + $0x8] sm:$0xf]
    %v142 = vld [vmem:[#allocation7 + $0xc] sm:$0xf]
    %v143 = vld [vmem:[#allocation7 + $0x10] sm:$0xf]
    %v144 = vld [vmem:[#allocation7 + $0x14] sm:$0xf]
    %v145 = vld [vmem:[#allocation7 + $0x18] sm:$0xf]
    %v146 = vld [vmem:[#allocation7 + $0x1c] sm:$0xf]
    %v147 = vld [vmem:[#allocation7 + $0x20] sm:$0xf]
    %v148 = vld [vmem:[#allocation7 + $0x24] sm:$0xf]
    %v149 = vld [vmem:[#allocation7 + $0x28] sm:$0xf]
    %v150 = vld [vmem:[#allocation7 + $0x2c] sm:$0xf]
    %v151 = vld [vmem:[#allocation7 + $0x30] sm:$0xf]
    %v152 = vld [vmem:[#allocation7 + $0x34] sm:$0xf]
    %v153 = vld [vmem:[#allocation7 + $0x38] sm:$0xf]
    %v154 = vld [vmem:[#allocation7 + $0x3c] sm:$0xf]
    %v155 = vld [vmem:[%s4] sm:$0x1]
    %v157 = vlaneseq
    %v158 = vshrl.u32 %v157, 7
    %v159 = vsub.s32 0, %v158
    %v160 = vrot.slane %v155, %v159
    %v178 = vunpack.c.l.b16 %v139
    %v179 = vunpack.c.l.b16 %v140
    %v180 = vunpack.c.l.b16 %v141
    %v181 = vunpack.c.l.b16 %v142
    %v182 = vunpack.c.l.b16 %v143
    %v183 = vunpack.c.l.b16 %v144
    %v184 = vunpack.c.l.b16 %v145
    %v185 = vunpack.c.l.b16 %v146
    %v186 = vunpack.c.l.b16 %v147
    %v187 = vunpack.c.l.b16 %v148
    %v188 = vunpack.c.l.b16 %v149
    %v189 = vunpack.c.l.b16 %v150
    %v190 = vunpack.c.l.b16 %v151
    %v191 = vunpack.c.l.b16 %v152
    %v192 = vunpack.c.l.b16 %v153
    %v193 = vunpack.c.l.b16 %v154
    %v194 = vpack.c.b16 %v179, %v178
    %v195 = vpack.c.b16 %v181, %v180
    %v196 = vpack.c.b16 %v183, %v182
    %v197 = vpack.c.b16 %v185, %v184
    %v198 = vpack.c.b16 %v187, %v186
    %v199 = vpack.c.b16 %v189, %v188
    %v200 = vpack.c.b16 %v191, %v190
    %v201 = vpack.c.b16 %v193, %v192
    %210 = vmatprep.subr.bf16.mxu0 0
    %211 = vmatpush1.bf16.msra.mxu0 %v194
    %212 = vmatprep.subr.bf16.mxu0 0
    %213 = vmatpush1.bf16.msra.mxu0 %v195
    %214 = vmatprep.subr.bf16.mxu0 0
    %215 = vmatpush1.bf16.msra.mxu0 %v196
    %216 = vmatprep.subr.bf16.mxu0 0
    %217 = vmatpush1.bf16.msra.mxu0 %v197
    %218 = vmatprep.subr.bf16.mxu0 0
    %219 = vmatpush1.bf16.msra.mxu0 %v198
    %220 = vmatprep.subr.bf16.mxu0 0
    %221 = vmatpush1.bf16.msra.mxu0 %v199
    %222 = vmatprep.subr.bf16.mxu0 0
    %223 = vmatpush1.bf16.msra.mxu0 %v200
    %224 = vmatprep.subr.bf16.mxu0 0
    %225 = vmatpush1.bf16.msra.mxu0 %v201
    %226 = vmatprep.subr.bf16.mxu0 0
    %227 = vmatpush1.bf16.msra.mxu0 0
    %228 = vmatprep.subr.bf16.mxu0 0
    %229 = vmatpush1.bf16.msra.mxu0 0
    %230 = vmatprep.subr.bf16.mxu0 0
    %231 = vmatpush1.bf16.msra.mxu0 0
    %232 = vmatprep.subr.bf16.mxu0 0
    %233 = vmatpush1.bf16.msra.mxu0 0
    %234 = vmatprep.subr.bf16.mxu0 0
    %235 = vmatpush1.bf16.msra.mxu0 0
    %236 = vmatprep.subr.bf16.mxu0 0
    %237 = vmatpush1.bf16.msra.mxu0 0
    %238 = vmatprep.subr.bf16.mxu0 0
    %239 = vmatpush1.bf16.msra.mxu0 0
    %240 = vmatprep.subr.bf16.mxu0 0
    %241 = vmatpush1.bf16.msra.mxu0 0
    %242 = vmatprep.mubr.bf16.mxu0 0
    %243 = vmatmul.mubr.bf16.gmra.mrb[0].mxu0 %v138
    %v244 = vpop.f32.mrb[0].mxu0
    %v245 = vadd.f32 %v160, %v244
    %v246 = vpop.f32.mrb[0].mxu0
    %v247 = vpop.f32.mrb[0].mxu0
    %v248 = vpop.f32.mrb[0].mxu0
    %249 = vdwg.mxu0
    %v250 = vmul.f32 %v245, 0.01
    %v251 = vmax.f32 %v245, %v250
    %v252 = vpack.c.bf16 %v251, %v251
    %v253 = vld [vmem:[#allocation8] sm:$0xf]
    %v254 = vld [vmem:[#allocation8 + $0x4] sm:$0xf]
    %v255 = vld [vmem:[#allocation8 + $0x8] sm:$0xf]
    %v256 = vld [vmem:[#allocation8 + $0xc] sm:$0xf]
    %v257 = vld [vmem:[#allocation8 + $0x10] sm:$0xf]
    %v258 = vld [vmem:[#allocation8 + $0x14] sm:$0xf]
    %v259 = vld [vmem:[#allocation8 + $0x18] sm:$0xf]
    %v260 = vld [vmem:[#allocation8 + $0x1c] sm:$0xf]
    %v261 = vld [vmem:[#allocation8 + $0x20] sm:$0xf]
    %v262 = vld [vmem:[#allocation8 + $0x24] sm:$0xf]
    %v263 = vld [vmem:[#allocation8 + $0x28] sm:$0xf]
    %v264 = vld [vmem:[#allocation8 + $0x2c] sm:$0xf]
    %v265 = vld [vmem:[#allocation8 + $0x30] sm:$0xf]
    %v266 = vld [vmem:[#allocation8 + $0x34] sm:$0xf]
    %v267 = vld [vmem:[#allocation8 + $0x38] sm:$0xf]
    %v268 = vld [vmem:[#allocation8 + $0x3c] sm:$0xf]
    %v269 = vld [vmem:[%s6] sm:$0x1]
    %v271 = vlaneseq
    %v272 = vshrl.u32 %v271, 7
    %v273 = vsub.s32 0, %v272
    %v274 = vrot.slane %v269, %v273
    %v292 = vunpack.c.l.b16 %v253
    %v293 = vunpack.c.l.b16 %v254
    %v294 = vunpack.c.l.b16 %v255
    %v295 = vunpack.c.l.b16 %v256
    %v296 = vunpack.c.l.b16 %v257
    %v297 = vunpack.c.l.b16 %v258
    %v298 = vunpack.c.l.b16 %v259
    %v299 = vunpack.c.l.b16 %v260
    %v300 = vunpack.c.l.b16 %v261
    %v301 = vunpack.c.l.b16 %v262
    %v302 = vunpack.c.l.b16 %v263
    %v303 = vunpack.c.l.b16 %v264
    %v304 = vunpack.c.l.b16 %v265
    %v305 = vunpack.c.l.b16 %v266
    %v306 = vunpack.c.l.b16 %v267
    %v307 = vunpack.c.l.b16 %v268
    %v308 = vpack.c.b16 %v293, %v292
    %v309 = vpack.c.b16 %v295, %v294
    %v310 = vpack.c.b16 %v297, %v296
    %v311 = vpack.c.b16 %v299, %v298
    %v312 = vpack.c.b16 %v301, %v300
    %v313 = vpack.c.b16 %v303, %v302
    %v314 = vpack.c.b16 %v305, %v304
    %v315 = vpack.c.b16 %v307, %v306
    %324 = vmatprep.subr.bf16.mxu0 0
    %325 = vmatpush1.bf16.msra.mxu0 %v308
    %326 = vmatprep.subr.bf16.mxu0 0
    %327 = vmatpush1.bf16.msra.mxu0 %v309
    %328 = vmatprep.subr.bf16.mxu0 0
    %329 = vmatpush1.bf16.msra.mxu0 %v310
    %330 = vmatprep.subr.bf16.mxu0 0
    %331 = vmatpush1.bf16.msra.mxu0 %v311
    %332 = vmatprep.subr.bf16.mxu0 0
    %333 = vmatpush1.bf16.msra.mxu0 %v312
    %334 = vmatprep.subr.bf16.mxu0 0
    %335 = vmatpush1.bf16.msra.mxu0 %v313
    %336 = vmatprep.subr.bf16.mxu0 0
    %337 = vmatpush1.bf16.msra.mxu0 %v314
    %338 = vmatprep.subr.bf16.mxu0 0
    %339 = vmatpush1.bf16.msra.mxu0 %v315
    %340 = vmatprep.subr.bf16.mxu0 0
    %341 = vmatpush1.bf16.msra.mxu0 0
    %342 = vmatprep.subr.bf16.mxu0 0
    %343 = vmatpush1.bf16.msra.mxu0 0
    %344 = vmatprep.subr.bf16.mxu0 0
    %345 = vmatpush1.bf16.msra.mxu0 0
    %346 = vmatprep.subr.bf16.mxu0 0
    %347 = vmatpush1.bf16.msra.mxu0 0
    %348 = vmatprep.subr.bf16.mxu0 0
    %349 = vmatpush1.bf16.msra.mxu0 0
    %350 = vmatprep.subr.bf16.mxu0 0
    %351 = vmatpush1.bf16.msra.mxu0 0
    %352 = vmatprep.subr.bf16.mxu0 0
    %353 = vmatpush1.bf16.msra.mxu0 0
    %354 = vmatprep.subr.bf16.mxu0 0
    %355 = vmatpush1.bf16.msra.mxu0 0
    %356 = vmatprep.mubr.bf16.mxu0 0
    %357 = vmatmul.mubr.bf16.gmra.mrb[0].mxu0 %v252
    %v358 = vpop.f32.mrb[0].mxu0
    %v359 = vadd.f32 %v274, %v358
    %v360 = vpop.f32.mrb[0].mxu0
    %v361 = vpop.f32.mrb[0].mxu0
    %v362 = vpop.f32.mrb[0].mxu0
    %363 = vdwg.mxu0
    %v364 = vmul.f32 %v359, 0.01
    %v365 = vmax.f32 %v359, %v364
    %vm366 = vcmask 130048
    %367 = vst.msk [vmem:[#allocation10] sm:$0xff] %vm366, %v365
    // Predicated region
    $region46: #{tpu_custom_call.1} parent=1 // pred_check
      _
    $region47: #{tpu_custom_call.1} parent=1 // pred_check_branch
      %369 = sbr.rel (0) target = $region49
    $region48: #{tpu_custom_call.1} parent=1 // pred_region
      %s371 = ssub.s32 128, 128
      %372 = vsyncadd [#allocation4], %s371
      %s374 = sshll.u32 [#allocation10], 4
      %s375 = int_to_ptr.vmem [resolvable:$true] %s374
      %377 = dma.vmem_to_hbm [thread:$0]  %s375, 128, %s7, [#allocation4]
    $region49: #{tpu_custom_call.1} parent=1 // pred_fallthru
      _
    // Predicated region
    $region50: #{tpu_custom_call.1} parent=1 // pred_check
      _
    $region51: #{tpu_custom_call.1} parent=1 // pred_check_branch
      %379 = sbr.rel (0) target = $region53
    $region52: #{tpu_custom_call.1} parent=1 // pred_region
      %380 = dma.done [#allocation4], 128
    $region53: #{tpu_custom_call.1} parent=1 // pred_fallthru
      _
    %381 = vsyncpa [#allocation3], 1
    %382 = vsyncpa [#allocation6], 1
    %383 = vsyncpa [#allocation9], 1
    %384 = vsyncpa [#allocation4], 1

// kernel: tpu_custom_call.1
$region0: #{tpu_custom_call.1}
  #allocation0 [shape = 'u32[]', space=smem, size = 0x4, offset = 0x4, fixed_abs, tag = 'smem constant byte address 0x4 - core index']
  #allocation1 [shape = 'u32[144,128]{1,0:T(1,128)}', space=vmem, size = 0x12000, scoped, tag = 'internal scratch']
  %s0 = inlined_call_operand.hbm [shape: bf16[8,8], index: 0, kind: input, shape index: {}]
  %s1 = inlined_call_operand.hbm [shape: bf16[8,128], index: 1, kind: input, shape index: {}]
  %s2 = inlined_call_operand.vmem [shape: f32[1,128], index: 2, kind: input, shape index: {}]
  %s3 = inlined_call_operand.hbm [shape: bf16[128,128], index: 3, kind: input, shape index: {}]
  %s4 = inlined_call_operand.vmem [shape: f32[1,128], index: 4, kind: input, shape index: {}]
  %s5 = inlined_call_operand.hbm [shape: bf16[128,128], index: 5, kind: input, shape index: {}]
  %s6 = inlined_call_operand.vmem [shape: f32[1,128], index: 6, kind: input, shape index: {}]
  %s7 = inlined_call_operand.hbm [shape: f32[8,16], index: 7, kind: output, shape index: {}]
  %s8 = sld [smem:[#allocation0]]
  $region54: #{tpu_custom_call.1} parent=0
    _
  %s10 = ssub.s32 1, %s8
  %s11 = scalar_select 0, %s10, %s8
  $region1: #{tpu_custom_call.1} parent=0
    #allocation2 [shape = 'u8[2048]{0}', space=vmem, size = 0x800, scoped, tag = 'input window, operand 0, single buffered']
    #allocation3 [shape = 's32[1]{0}', space=sflag, size = 0x4, scoped, tag = 'scoped memory for tpu_custom_call.1']
    #allocation4 [shape = 's32[1]{0}', space=sflag, size = 0x4, scoped, tag = 'scoped memory for tpu_custom_call.1']
    #allocation5 [shape = 'u8[2048]{0}', space=vmem, size = 0x800, scoped, tag = 'input window, operand 1, single buffered']
    #allocation6 [shape = 's32[1]{0}', space=sflag, size = 0x4, scoped, tag = 'scoped memory for tpu_custom_call.1']
    #allocation7 [shape = 'u8[32768]{0}', space=vmem, size = 0x8000, scoped, tag = 'input window, operand 3, single buffered']
    #allocation8 [shape = 'u8[32768]{0}', space=vmem, size = 0x8000, scoped, tag = 'input window, operand 5, single buffered']
    #allocation9 [shape = 's32[1]{0}', space=sflag, size = 0x4, scoped, tag = 'scoped memory for tpu_custom_call.1']
    #allocation10 [shape = 'u8[4096]{0}', space=vmem, size = 0x1000, scoped, tag = 'output window, operand 0, single buffered']
    %12 = vsyncpa [#allocation3], 0
    %13 = vsyncpa [#allocation6], 0
    %14 = vsyncpa [#allocation9], 0
    %15 = vsyncpa [#allocation4], 0
    // Predicated region
    $region2: #{tpu_custom_call.1} parent=1 // pred_check
      _
    $region3: #{tpu_custom_call.1} parent=1 // pred_check_branch
      %17 = sbr.rel (0) target = $region5
    $region4: #{tpu_custom_call.1} parent=1 // pred_region
      %s19 = ssub.s32 64, 64
      %20 = vsyncadd [#allocation3], %s19
      %s22 = sshll.u32 [#allocation2], 4
      %s23 = int_to_ptr.vmem [resolvable:$true] %s22
      %25 = dma.hbm_to_vmem [thread:$0]  %s0, 64, %s23, [#allocation3]
    $region5: #{tpu_custom_call.1} parent=1 // pred_fallthru
      _
    // Predicated region
    $region6: #{tpu_custom_call.1} parent=1 // pred_check
      _
    $region7: #{tpu_custom_call.1} parent=1 // pred_check_branch
      %27 = sbr.rel (0) target = $region9
    $region8: #{tpu_custom_call.1} parent=1 // pred_region
      %s29 = ssub.s32 64, 64
      %30 = vsyncadd [#allocation6], %s29
      %s32 = sshll.u32 [#allocation5], 4
      %s33 = int_to_ptr.vmem [resolvable:$true] %s32
      %35 = dma.hbm_to_vmem [thread:$0]  %s1, 64, %s33, [#allocation6]
    $region9: #{tpu_custom_call.1} parent=1 // pred_fallthru
      _
    // Predicated region
    $region10: #{tpu_custom_call.1} parent=1 // pred_check
      _
    $region11: #{tpu_custom_call.1} parent=1 // pred_check_branch
      %37 = sbr.rel (0) target = $region13
    $region12: #{tpu_custom_call.1} parent=1 // pred_region
      _
    $region13: #{tpu_custom_call.1} parent=1 // pred_fallthru
      _
    // Predicated region
    $region14: #{tpu_custom_call.1} parent=1 // pred_check
      _
    $region15: #{tpu_custom_call.1} parent=1 // pred_check_branch
      %39 = sbr.rel (0) target = $region17
    $region16: #{tpu_custom_call.1} parent=1 // pred_region
      %s41 = ssub.s32 1024, 1024
      %42 = vsyncadd [#allocation6], %s41
      %s43 = sshll.u32 [#allocation7], 4
      %s44 = int_to_ptr.vmem [resolvable:$true] %s43
      %49 = dma.hbm_to_vmem [thread:$0]  %s3, 1024, %s44, [#allocation6], 64, 64, 4
    $region17: #{tpu_custom_call.1} parent=1 // pred_fallthru
      _
    // Predicated region
    $region18: #{tpu_custom_call.1} parent=1 // pred_check
      _
    $region19: #{tpu_custom_call.1} parent=1 // pred_check_branch
      %51 = sbr.rel (0) target = $region21
    $region20: #{tpu_custom_call.1} parent=1 // pred_region
      _
    $region21: #{tpu_custom_call.1} parent=1 // pred_fallthru
      _
    // Predicated region
    $region22: #{tpu_custom_call.1} parent=1 // pred_check
      _
    $region23: #{tpu_custom_call.1} parent=1 // pred_check_branch
      %53 = sbr.rel (0) target = $region25
    $region24: #{tpu_custom_call.1} parent=1 // pred_region
      %s55 = ssub.s32 1024, 1024
      %56 = vsyncadd [#allocation9], %s55
      %s57 = sshll.u32 [#allocation8], 4
      %s58 = int_to_ptr.vmem [resolvable:$true] %s57
      %63 = dma.hbm_to_vmem [thread:$0]  %s5, 1024, %s58, [#allocation9], 64, 64, 4
    $region25: #{tpu_custom_call.1} parent=1 // pred_fallthru
      _
    // Predicated region
    $region26: #{tpu_custom_call.1} parent=1 // pred_check
      _
    $region27: #{tpu_custom_call.1} parent=1 // pred_check_branch
      %65 = sbr.rel (0) target = $region29
    $region28: #{tpu_custom_call.1} parent=1 // pred_region
      _
    $region29: #{tpu_custom_call.1} parent=1 // pred_fallthru
      _
    // Predicated region
    $region30: #{tpu_custom_call.1} parent=1 // pred_check
      _
    $region31: #{tpu_custom_call.1} parent=1 // pred_check_branch
      %67 = sbr.rel (0) target = $region33
    $region32: #{tpu_custom_call.1} parent=1 // pred_region
      %68 = dma.done [#allocation3], 64
    $region33: #{tpu_custom_call.1} parent=1 // pred_fallthru
      _
    // Predicated region
    $region34: #{tpu_custom_call.1} parent=1 // pred_check
      _
    $region35: #{tpu_custom_call.1} parent=1 // pred_check_branch
      %70 = sbr.rel (0) target = $region37
    $region36: #{tpu_custom_call.1} parent=1 // pred_region
      %71 = dma.done [#allocation6], 64
    $region37: #{tpu_custom_call.1} parent=1 // pred_fallthru
      _
    // Predicated region
    $region38: #{tpu_custom_call.1} parent=1 // pred_check
      _
    $region39: #{tpu_custom_call.1} parent=1 // pred_check_branch
      %73 = sbr.rel (0) target = $region41
    $region40: #{tpu_custom_call.1} parent=1 // pred_region
      %74 = dma.done [#allocation6], 1024
    $region41: #{tpu_custom_call.1} parent=1 // pred_fallthru
      _
    // Predicated region
    $region42: #{tpu_custom_call.1} parent=1 // pred_check
      _
    $region43: #{tpu_custom_call.1} parent=1 // pred_check_branch
      %76 = sbr.rel (0) target = $region45
    $region44: #{tpu_custom_call.1} parent=1 // pred_region
      %77 = dma.done [#allocation9], 1024
    $region45: #{tpu_custom_call.1} parent=1 // pred_fallthru
      _
    %v79 = vld [vmem:[#allocation2] sm:$0xf]
    %v80 = vld [vmem:[#allocation5] sm:$0xf]
    %v81 = vld [vmem:[%s2] sm:$0x1]
    %v83 = vlaneseq
    %v84 = vshrl.u32 %v83, 7
    %v85 = vsub.s32 0, %v84
    %v86 = vrot.slane %v81, %v85
    %vm88 = vcmask 64512
    %v90 = vsel %vm88, %v79, 0
    %vm92 = vcmask 1043456
    %v94 = vsel %vm92, %v80, 0
    %96 = vmatprep.subr.bf16.mxu0 0
    %97 = vmatpush1.bf16.msra.mxu0 %v94
    %98 = vmatprep.subr.bf16.mxu0 0
    %99 = vmatpush1.bf16.msra.mxu0 0
    %100 = vmatprep.subr.bf16.mxu0 0
    %101 = vmatpush1.bf16.msra.mxu0 0
    %102 = vmatprep.subr.bf16.mxu0 0
    %103 = vmatpush1.bf16.msra.mxu0 0
    %104 = vmatprep.subr.bf16.mxu0 0
    %105 = vmatpush1.bf16.msra.mxu0 0
    %106 = vmatprep.subr.bf16.mxu0 0
    %107 = vmatpush1.bf16.msra.mxu0 0
    %108 = vmatprep.subr.bf16.mxu0 0
    %109 = vmatpush1.bf16.msra.mxu0 0
    %110 = vmatprep.subr.bf16.mxu0 0
    %111 = vmatpush1.bf16.msra.mxu0 0
    %112 = vmatprep.subr.bf16.mxu0 0
    %113 = vmatpush1.bf16.msra.mxu0 0
    %114 = vmatprep.subr.bf16.mxu0 0
    %115 = vmatpush1.bf16.msra.mxu0 0
    %116 = vmatprep.subr.bf16.mxu0 0
    %117 = vmatpush1.bf16.msra.mxu0 0
    %118 = vmatprep.subr.bf16.mxu0 0
    %119 = vmatpush1.bf16.msra.mxu0 0
    %120 = vmatprep.subr.bf16.mxu0 0
    %121 = vmatpush1.bf16.msra.mxu0 0
    %122 = vmatprep.subr.bf16.mxu0 0
    %123 = vmatpush1.bf16.msra.mxu0 0
    %124 = vmatprep.subr.bf16.mxu0 0
    %125 = vmatpush1.bf16.msra.mxu0 0
    %126 = vmatprep.subr.bf16.mxu0 0
    %127 = vmatpush1.bf16.msra.mxu0 0
    %128 = vmatprep.mubr.bf16.mxu0 0
    %129 = vmatmul.mubr.bf16.gmra.mrb[0].mxu0 %v90
    %v130 = vpop.f32.mrb[0].mxu0
    %v131 = vadd.f32 %v86, %v130
    %v132 = vpop.f32.mrb[0].mxu0
    %v133 = vpop.f32.mrb[0].mxu0
    %v134 = vpop.f32.mrb[0].mxu0
    %135 = vdwg.mxu0
    %v136 = vmul.f32 %v131, 0.01
    %v137 = vmax.f32 %v131, %v136
    %v138 = vpack.c.bf16 %v137, %v137
    %v139 = vld [vmem:[#allocation7] sm:$0xf]
    %v140 = vld [vmem:[#allocation7 + $0x4] sm:$0xf]
    %v141 = vld [vmem:[#allocation7 + $0x8] sm:$0xf]
    %v142 = vld [vmem:[#allocation7 + $0xc] sm:$0xf]
    %v143 = vld [vmem:[#allocation7 + $0x10] sm:$0xf]
    %v144 = vld [vmem:[#allocation7 + $0x14] sm:$0xf]
    %v145 = vld [vmem:[#allocation7 + $0x18] sm:$0xf]
    %v146 = vld [vmem:[#allocation7 + $0x1c] sm:$0xf]
    %v147 = vld [vmem:[#allocation7 + $0x20] sm:$0xf]
    %v148 = vld [vmem:[#allocation7 + $0x24] sm:$0xf]
    %v149 = vld [vmem:[#allocation7 + $0x28] sm:$0xf]
    %v150 = vld [vmem:[#allocation7 + $0x2c] sm:$0xf]
    %v151 = vld [vmem:[#allocation7 + $0x30] sm:$0xf]
    %v152 = vld [vmem:[#allocation7 + $0x34] sm:$0xf]
    %v153 = vld [vmem:[#allocation7 + $0x38] sm:$0xf]
    %v154 = vld [vmem:[#allocation7 + $0x3c] sm:$0xf]
    %v155 = vld [vmem:[%s4] sm:$0x1]
    %v157 = vlaneseq
    %v158 = vshrl.u32 %v157, 7
    %v159 = vsub.s32 0, %v158
    %v160 = vrot.slane %v155, %v159
    %v178 = vunpack.c.l.b16 %v139
    %v179 = vunpack.c.l.b16 %v140
    %v180 = vunpack.c.l.b16 %v141
    %v181 = vunpack.c.l.b16 %v142
    %v182 = vunpack.c.l.b16 %v143
    %v183 = vunpack.c.l.b16 %v144
    %v184 = vunpack.c.l.b16 %v145
    %v185 = vunpack.c.l.b16 %v146
    %v186 = vunpack.c.l.b16 %v147
    %v187 = vunpack.c.l.b16 %v148
    %v188 = vunpack.c.l.b16 %v149
    %v189 = vunpack.c.l.b16 %v150
    %v190 = vunpack.c.l.b16 %v151
    %v191 = vunpack.c.l.b16 %v152
    %v192 = vunpack.c.l.b16 %v153
    %v193 = vunpack.c.l.b16 %v154
    %v194 = vpack.c.b16 %v179, %v178
    %v195 = vpack.c.b16 %v181, %v180
    %v196 = vpack.c.b16 %v183, %v182
    %v197 = vpack.c.b16 %v185, %v184
    %v198 = vpack.c.b16 %v187, %v186
    %v199 = vpack.c.b16 %v189, %v188
    %v200 = vpack.c.b16 %v191, %v190
    %v201 = vpack.c.b16 %v193, %v192
    %210 = vmatprep.subr.bf16.mxu0 0
    %211 = vmatpush1.bf16.msra.mxu0 %v194
    %212 = vmatprep.subr.bf16.mxu0 0
    %213 = vmatpush1.bf16.msra.mxu0 %v195
    %214 = vmatprep.subr.bf16.mxu0 0
    %215 = vmatpush1.bf16.msra.mxu0 %v196
    %216 = vmatprep.subr.bf16.mxu0 0
    %217 = vmatpush1.bf16.msra.mxu0 %v197
    %218 = vmatprep.subr.bf16.mxu0 0
    %219 = vmatpush1.bf16.msra.mxu0 %v198
    %220 = vmatprep.subr.bf16.mxu0 0
    %221 = vmatpush1.bf16.msra.mxu0 %v199
    %222 = vmatprep.subr.bf16.mxu0 0
    %223 = vmatpush1.bf16.msra.mxu0 %v200
    %224 = vmatprep.subr.bf16.mxu0 0
    %225 = vmatpush1.bf16.msra.mxu0 %v201
    %226 = vmatprep.subr.bf16.mxu0 0
    %227 = vmatpush1.bf16.msra.mxu0 0
    %228 = vmatprep.subr.bf16.mxu0 0
    %229 = vmatpush1.bf16.msra.mxu0 0
    %230 = vmatprep.subr.bf16.mxu0 0
    %231 = vmatpush1.bf16.msra.mxu0 0
    %232 = vmatprep.subr.bf16.mxu0 0
    %233 = vmatpush1.bf16.msra.mxu0 0
    %234 = vmatprep.subr.bf16.mxu0 0
    %235 = vmatpush1.bf16.msra.mxu0 0
    %236 = vmatprep.subr.bf16.mxu0 0
    %237 = vmatpush1.bf16.msra.mxu0 0
    %238 = vmatprep.subr.bf16.mxu0 0
    %239 = vmatpush1.bf16.msra.mxu0 0
    %240 = vmatprep.subr.bf16.mxu0 0
    %241 = vmatpush1.bf16.msra.mxu0 0
    %242 = vmatprep.mubr.bf16.mxu0 0
    %243 = vmatmul.mubr.bf16.gmra.mrb[0].mxu0 %v138
    %v244 = vpop.f32.mrb[0].mxu0
    %v245 = vadd.f32 %v160, %v244
    %v246 = vpop.f32.mrb[0].mxu0
    %v247 = vpop.f32.mrb[0].mxu0
    %v248 = vpop.f32.mrb[0].mxu0
    %249 = vdwg.mxu0
    %v250 = vmul.f32 %v245, 0.01
    %v251 = vmax.f32 %v245, %v250
    %v252 = vpack.c.bf16 %v251, %v251
    %v253 = vld [vmem:[#allocation8] sm:$0xf]
    %v254 = vld [vmem:[#allocation8 + $0x4] sm:$0xf]
    %v255 = vld [vmem:[#allocation8 + $0x8] sm:$0xf]
    %v256 = vld [vmem:[#allocation8 + $0xc] sm:$0xf]
    %v257 = vld [vmem:[#allocation8 + $0x10] sm:$0xf]
    %v258 = vld [vmem:[#allocation8 + $0x14] sm:$0xf]
    %v259 = vld [vmem:[#allocation8 + $0x18] sm:$0xf]
    %v260 = vld [vmem:[#allocation8 + $0x1c] sm:$0xf]
    %v261 = vld [vmem:[#allocation8 + $0x20] sm:$0xf]
    %v262 = vld [vmem:[#allocation8 + $0x24] sm:$0xf]
    %v263 = vld [vmem:[#allocation8 + $0x28] sm:$0xf]
    %v264 = vld [vmem:[#allocation8 + $0x2c] sm:$0xf]
    %v265 = vld [vmem:[#allocation8 + $0x30] sm:$0xf]
    %v266 = vld [vmem:[#allocation8 + $0x34] sm:$0xf]
    %v267 = vld [vmem:[#allocation8 + $0x38] sm:$0xf]
    %v268 = vld [vmem:[#allocation8 + $0x3c] sm:$0xf]
    %v269 = vld [vmem:[%s6] sm:$0x1]
    %v271 = vlaneseq
    %v272 = vshrl.u32 %v271, 7
    %v273 = vsub.s32 0, %v272
    %v274 = vrot.slane %v269, %v273
    %v292 = vunpack.c.l.b16 %v253
    %v293 = vunpack.c.l.b16 %v254
    %v294 = vunpack.c.l.b16 %v255
    %v295 = vunpack.c.l.b16 %v256
    %v296 = vunpack.c.l.b16 %v257
    %v297 = vunpack.c.l.b16 %v258
    %v298 = vunpack.c.l.b16 %v259
    %v299 = vunpack.c.l.b16 %v260
    %v300 = vunpack.c.l.b16 %v261
    %v301 = vunpack.c.l.b16 %v262
    %v302 = vunpack.c.l.b16 %v263
    %v303 = vunpack.c.l.b16 %v264
    %v304 = vunpack.c.l.b16 %v265
    %v305 = vunpack.c.l.b16 %v266
    %v306 = vunpack.c.l.b16 %v267
    %v307 = vunpack.c.l.b16 %v268
    %v308 = vpack.c.b16 %v293, %v292
    %v309 = vpack.c.b16 %v295, %v294
    %v310 = vpack.c.b16 %v297, %v296
    %v311 = vpack.c.b16 %v299, %v298
    %v312 = vpack.c.b16 %v301, %v300
    %v313 = vpack.c.b16 %v303, %v302
    %v314 = vpack.c.b16 %v305, %v304
    %v315 = vpack.c.b16 %v307, %v306
    %324 = vmatprep.subr.bf16.mxu0 0
    %325 = vmatpush1.bf16.msra.mxu0 %v308
    %326 = vmatprep.subr.bf16.mxu0 0
    %327 = vmatpush1.bf16.msra.mxu0 %v309
    %328 = vmatprep.subr.bf16.mxu0 0
    %329 = vmatpush1.bf16.msra.mxu0 %v310
    %330 = vmatprep.subr.bf16.mxu0 0
    %331 = vmatpush1.bf16.msra.mxu0 %v311
    %332 = vmatprep.subr.bf16.mxu0 0
    %333 = vmatpush1.bf16.msra.mxu0 %v312
    %334 = vmatprep.subr.bf16.mxu0 0
    %335 = vmatpush1.bf16.msra.mxu0 %v313
    %336 = vmatprep.subr.bf16.mxu0 0
    %337 = vmatpush1.bf16.msra.mxu0 %v314
    %338 = vmatprep.subr.bf16.mxu0 0
    %339 = vmatpush1.bf16.msra.mxu0 %v315
    %340 = vmatprep.subr.bf16.mxu0 0
    %341 = vmatpush1.bf16.msra.mxu0 0
    %342 = vmatprep.subr.bf16.mxu0 0
    %343 = vmatpush1.bf16.msra.mxu0 0
    %344 = vmatprep.subr.bf16.mxu0 0
    %345 = vmatpush1.bf16.msra.mxu0 0
    %346 = vmatprep.subr.bf16.mxu0 0
    %347 = vmatpush1.bf16.msra.mxu0 0
    %348 = vmatprep.subr.bf16.mxu0 0
    %349 = vmatpush1.bf16.msra.mxu0 0
    %350 = vmatprep.subr.bf16.mxu0 0
    %351 = vmatpush1.bf16.msra.mxu0 0
    %352 = vmatprep.subr.bf16.mxu0 0
    %353 = vmatpush1.bf16.msra.mxu0 0
    %354 = vmatprep.subr.bf16.mxu0 0
    %355 = vmatpush1.bf16.msra.mxu0 0
    %356 = vmatprep.mubr.bf16.mxu0 0
    %357 = vmatmul.mubr.bf16.gmra.mrb[0].mxu0 %v252
    %v358 = vpop.f32.mrb[0].mxu0
    %v359 = vadd.f32 %v274, %v358
    %v360 = vpop.f32.mrb[0].mxu0
    %v361 = vpop.f32.mrb[0].mxu0
    %v362 = vpop.f32.mrb[0].mxu0
    %363 = vdwg.mxu0
    %v364 = vmul.f32 %v359, 0.01
    %v365 = vmax.f32 %v359, %v364
    %vm366 = vcmask 130048
    %367 = vst.msk [vmem:[#allocation10] sm:$0xff] %vm366, %v365
    // Predicated region
    $region46: #{tpu_custom_call.1} parent=1 // pred_check
      _
    $region47: #{tpu_custom_call.1} parent=1 // pred_check_branch
      %369 = sbr.rel (0) target = $region49
    $region48: #{tpu_custom_call.1} parent=1 // pred_region
      %s371 = ssub.s32 128, 128
      %372 = vsyncadd [#allocation4], %s371
      %s374 = sshll.u32 [#allocation10], 4
      %s375 = int_to_ptr.vmem [resolvable:$true] %s374
      %377 = dma.vmem_to_hbm [thread:$0]  %s375, 128, %s7, [#allocation4]
    $region49: #{tpu_custom_call.1} parent=1 // pred_fallthru
      _
    // Predicated region
    $region50: #{tpu_custom_call.1} parent=1 // pred_check
      _
    $region51: #{tpu_custom_call.1} parent=1 // pred_check_branch
      %379 = sbr.rel (0) target = $region53
    $region52: #{tpu_custom_call.1} parent=1 // pred_region
      %380 = dma.done [#allocation4], 128
    $region53: #{tpu_custom_call.1} parent=1 // pred_fallthru
      _
    %381 = vsyncpa [#allocation3], 1
    %382 = vsyncpa [#allocation6], 1
    %383 = vsyncpa [#allocation9], 1
    %384 = vsyncpa [#allocation4], 1

</llo_original>
